<compile_context>
chip_gen: v7x
topology: tpu7x:2x2x1
jax: 0.10.0
libtpu: 0.0.40
codegen_flags: <defaults>
</compile_context>

<pallas_src>
import functools

import jax
import jax.numpy as jnp
from jax import lax
from jax.experimental import pallas as pl
from jax.experimental.pallas import tpu as pltpu


_PALLAS_MIN_BOXES = 4096      # below this a fused XLA reduction beats a launch
_DEFAULT_TILE_ROWS = 8192     # rows of 128 lanes: 4 MiB / input / grid step
_CHUNK_ROWS = 512             # in-kernel strip-mine size (256 KiB per value)


def _cdiv(a, b):
    return (a + b - 1) // b


def _round_up(a, b):
    return _cdiv(a, b) * b


# ---------------------------------------------------------------------------
# pltpu.roll direction probe (cached).  The kernel needs
#   shl(v, k)[:, l] == v[:, (l + k) % 128].
# Under np.roll semantics that is shift = (-k) % 128; under the opposite
# rotation direction it is shift = k.  Probe once so either way is correct.
# ---------------------------------------------------------------------------
_ROLL_IS_NUMPY = None


def _probe_roll_kernel(x_ref, o_ref):
    o_ref[...] = pltpu.roll(x_ref[...], shift=1, axis=1)


def _roll_matches_numpy():
    global _ROLL_IS_NUMPY
    if _ROLL_IS_NUMPY is None:
        x = jnp.arange(8 * 128, dtype=jnp.float32).reshape(8, 128)
        y = pl.pallas_call(
            _probe_roll_kernel,
            out_shape=jax.ShapeDtypeStruct((8, 128), jnp.float32),
        )(x)
        # np.roll(x, 1, axis=1)[0, 1] == x[0, 0] == 0.0
        _ROLL_IS_NUMPY = bool(float(y[0, 1]) == 0.0)
    return _ROLL_IS_NUMPY


# ---------------------------------------------------------------------------
# Kernel
# ---------------------------------------------------------------------------
def _iou_loss_kernel(n_ref, pred_ref, targ_ref, out_ref, *,
                     tile_rows, chunk_rows, tiles_per_core, roll_is_np):
    # n_ref    : (1,) int32 SMEM scalar prefetch -- number of real boxes
    # pred_ref : (tile_rows, 128) f32; lanes 4k..4k+3 = x, y, w, h of a box
    # targ_ref : (tile_rows, 128) f32
    # out_ref  : (8, 128) f32 per-core partial-sum accumulator (output block)
    c = pl.program_id(0)                       # core index ("parallel")
    t = pl.program_id(1)                       # tile index within the core
    tile_idx = c * tiles_per_core + t          # logical (unclamped) tile index

    @pl.when(t == 0)
    def _init():
        out_ref[...] = jnp.zeros_like(out_ref)

    def shl(v, k):
        # shl(v, k)[:, l] == v[:, (l + k) % 128]; wrapped lanes are masked out.
        shift = (-k) % 128 if roll_is_np else (k % 128)
        return pltpu.roll(v, shift=shift, axis=1)

    col = lax.broadcasted_iota(jnp.int32, (chunk_rows, 128), 1)
    row = lax.broadcasted_iota(jnp.int32, (chunk_rows, 128), 0)
    lane_ok = (col & 3) == 0                   # keep only the x-coordinate lane
    limit = 4 * n_ref[0]                       # flat-index bound of real boxes
    base = tile_idx * tile_rows * 128

    def chunk_body(j, acc):
        r0 = pl.multiple_of(j * chunk_rows, 8)
        p = pred_ref[pl.ds(r0, chunk_rows), :]
        q = targ_ref[pl.ds(r0, chunk_rows), :]

        p_wh = shl(p, 2)                       # lanes ==0: pw ; ==1: ph
        q_wh = shl(q, 2)
        p2 = p + p_wh                          # lanes ==0: px2 ; ==1: py2
        q2 = q + q_wh

        d = jnp.minimum(p2, q2) - jnp.maximum(p, q)          # ==0: iw ; ==1: ih
        inter = jnp.maximum(d * shl(d, 1), 0.0)              # clamp(iw*ih, 0)
        areas = p_wh * shl(p_wh, 1) + q_wh * shl(q_wh, 1)    # pw*ph + tw*th
        denom = areas - inter + 1e-6                         # union + eps

        r = pl.reciprocal(denom, approx=True)                # EUP rcp (idle slot)
        r = r * (2.0 - denom * r)                            # 1 Newton step
        iou = inter * r                                      # valid at lanes ==0

        flat = base + (r0 + row) * 128 + col
        keep = jnp.logical_and(lane_ok, flat < limit)
        iou = jnp.where(keep, iou, 0.0)
        return acc + iou.reshape(chunk_rows // 8, 8, 128).sum(axis=0)

    partial = lax.fori_loop(0, tile_rows // chunk_rows, chunk_body,
                            jnp.zeros((8, 128), jnp.float32))
    out_ref[...] += partial


# ---------------------------------------------------------------------------
# Wrappers
# ---------------------------------------------------------------------------
@functools.partial(
    jax.jit,
    static_argnames=("n_pad", "tile_rows", "chunk_rows", "num_cores",
                     "tiles_per_core", "num_tiles", "roll_is_np"))
def _iou_loss_pallas_jit(pred, target, n_valid, *, n_pad, tile_rows,
                         chunk_rows, num_cores, tiles_per_core, num_tiles,
                         roll_is_np):
    n = pred.shape[0]
    pred = pred.astype(jnp.float32)
    target = target.astype(jnp.float32)
    if n_pad != n:
        # Only when n is not 32-box aligned (or tiny); padded boxes are both
        # all-zero and masked by the in-kernel `flat < 4*n` test.
        pred = jnp.pad(pred, ((0, n_pad - n), (0, 0)))
        target = jnp.pad(target, ((0, n_pad - n), (0, 0)))
    rows = n_pad // 32
    pred_r = pred.reshape(rows, 128)           # contiguous (zero-copy) reshape
    targ_r = target.reshape(rows, 128)

    def tile_map(c, t, n_s):                   # n_s: prefetched scalar (unused)
        # Clamp so an over-covering grid never issues an out-of-range block
        # DMA; duplicated tiles contribute zero via the unclamped flat-index
        # mask inside the kernel.
        return (jnp.minimum(c * tiles_per_core + t, num_tiles - 1), 0)

    grid_spec = pltpu.PrefetchScalarGridSpec(
        num_scalar_prefetch=1,
        grid=(num_cores, tiles_per_core),
        in_specs=[
            pl.BlockSpec((tile_rows, 128), tile_map),
            pl.BlockSpec((tile_rows, 128), tile_map),
        ],
        out_specs=pl.BlockSpec((None, 8, 128), lambda c, t, n_s: (c, 0, 0)),
    )

    kernel = functools.partial(
        _iou_loss_kernel, tile_rows=tile_rows, chunk_rows=chunk_rows,
        tiles_per_core=tiles_per_core, roll_is_np=roll_is_np)

    partials = pl.pallas_call(
        kernel,
        out_shape=jax.ShapeDtypeStruct((num_cores, 8, 128), jnp.float32),
        grid_spec=grid_spec,
        compiler_params=pltpu.CompilerParams(
            dimension_semantics=("parallel", "arbitrary"),
            vmem_limit_bytes=32 * 1024 * 1024),
        cost_estimate=pl.CostEstimate(
            flops=30 * n_pad,
            transcendentals=n_pad,
            bytes_accessed=2 * n_pad * 4 * 4 + num_cores * 8 * 128 * 4),
    )(n_valid, pred_r, targ_r)

    total = jnp.sum(partials)
    # NOTE: n == 0 gives NaN, matching torch.mean of an empty tensor.
    return 1.0 - total / n_valid[0].astype(jnp.float32)


def _iou_loss_pallas(pred, target, *, tile_rows=None):
    n = pred.shape[0]
    # Zero-copy path whenever n is a multiple of 32 boxes (and >= 256).
    n_pad = max(_round_up(max(n, 1), 32), 256)
    rows = n_pad // 32

    if tile_rows is None:
        tile_rows = _DEFAULT_TILE_ROWS
    tile_rows = max(8, (min(tile_rows, rows) // 8) * 8)
    if tile_rows >= _CHUNK_ROWS:
        tile_rows = (tile_rows // _CHUNK_ROWS) * _CHUNK_ROWS
        chunk_rows = _CHUNK_ROWS
    else:
        chunk_rows = tile_rows

    num_tiles = _cdiv(rows, tile_rows)
    num_cores = 1 if num_tiles == 1 else 2     # v7x megacore split
    tiles_per_core = _cdiv(num_tiles, num_cores)
    n_valid = jnp.array([n], dtype=jnp.int32)
    return _iou_loss_pallas_jit(
        pred, target, n_valid, n_pad=n_pad, tile_rows=tile_rows,
        chunk_rows=chunk_rows, num_cores=num_cores,
        tiles_per_core=tiles_per_core, num_tiles=num_tiles,
        roll_is_np=_roll_matches_numpy())


@jax.jit
def _iou_loss_ref(pred, target):
    """Pure-JAX reference mirroring the PyTorch module exactly."""
    pred = pred.astype(jnp.float32)
    target = target.astype(jnp.float32)

    def conv(b):
        return jnp.stack(
            [b[:, 0], b[:, 1], b[:, 0] + b[:, 2], b[:, 1] + b[:, 3]], axis=1)

    p = conv(pred)
    t = conv(target)
    inter = ((jnp.minimum(p[:, 2], t[:, 2]) - jnp.maximum(p[:, 0], t[:, 0])) *
             (jnp.minimum(p[:, 3], t[:, 3]) - jnp.maximum(p[:, 1], t[:, 1])))
    inter = jnp.maximum(inter, 0.0)
    union = ((p[:, 2] - p[:, 0]) * (p[:, 3] - p[:, 1]) +
             (t[:, 2] - t[:, 0]) * (t[:, 3] - t[:, 1]) - inter)
    iou = inter / (union + 1e-6)
    return 1.0 - jnp.mean(iou)


def iou_loss(pred, target, *, force_pallas=False, tile_rows=None):
    """pred, target: [N, 4] boxes as (x, y, w, h). Returns scalar 1 - mean IoU."""
    assert pred.shape == target.shape and pred.ndim == 2 and pred.shape[1] == 4
    n = pred.shape[0]
    if not force_pallas and n < _PALLAS_MIN_BOXES:
        # Tiny N: pallas_call launch/DMA overhead dominates; fused XLA wins.
        return _iou_loss_ref(pred, target)
    return _iou_loss_pallas(pred, target, tile_rows=tile_rows)


if __name__ == "__main__":
    key = jax.random.PRNGKey(0)

    def make_boxes(k, n):
        k1, k2 = jax.random.split(k)
        xy = jax.random.uniform(k1, (n, 2), jnp.float32, 0.0, 10.0)
        wh = jax.random.uniform(k2, (n, 2), jnp.float32, 1.0, 5.0)
        return jnp.concatenate([xy, wh], axis=1)       # [N, 4] (x, y, w, h)

    k1, k2, k3, k4, k5, k6 = jax.random.split(key, 6)

    # Case 1: small shape implied by the module (N=8 boxes of 4 coords),
    # forced through the Pallas path (single tile, heavy padding + masking).
    pred_s, tgt_s = make_boxes(k1, 8), make_boxes(k2, 8)
    loss_s = jax.block_until_ready(iou_loss(pred_s, tgt_s, force_pallas=True))
    ref_s = jax.block_until_ready(_iou_loss_ref(pred_s, tgt_s))
    assert jnp.allclose(loss_s, ref_s, atol=1e-5, rtol=1e-5), (loss_s, ref_s)

    # Case 2: unaligned N (pad path) with a small tile override so the grid
    # has several steps per core and an odd tile count (exercises init /
    # accumulate / boundary-clamped duplicate tile on the second core).
    pred_m, tgt_m = make_boxes(k3, 700), make_boxes(k4, 700)
    loss_m = jax.block_until_ready(
        iou_loss(pred_m, tgt_m, force_pallas=True, tile_rows=8))
    ref_m = jax.block_until_ready(_iou_loss_ref(pred_m, tgt_m))
    assert jnp.allclose(loss_m, ref_m, atol=1e-5, rtol=1e-5), (loss_m, ref_m)

    # Case 3: 32-box aligned N (zero-copy reshape fast path, default tiling).
    pred_l, tgt_l = make_boxes(k5, 2048), make_boxes(k6, 2048)
    loss_l = jax.block_until_ready(iou_loss(pred_l, tgt_l, force_pallas=True))
    ref_l = jax.block_until_ready(_iou_loss_ref(pred_l, tgt_l))
    assert jnp.allclose(loss_l, ref_l, atol=1e-5, rtol=1e-5), (loss_l, ref_l)

    print("KERNEL_OK")
</pallas_src>

<mosaic_0001>
module attributes {stable_mosaic.version = 11 : i64} {
  func.func @_probe_roll_kernel(%arg0: memref<8x128xf32, #tpu.memory_space<vmem>>, %arg1: memref<8x128xf32, #tpu.memory_space<vmem>>) attributes {dimension_semantics = [], scalar_prefetch = 0 : i64, scratch_operands = 0 : i64, tpu.core_type = #tpu.core_type<tc>} {
    %c0 = arith.constant 0 : index
    %c0_0 = arith.constant 0 : index
    %0 = vector.load %arg0[%c0, %c0_0] : memref<8x128xf32, #tpu.memory_space<vmem>>, vector<8x128xf32>
    %c1_i32 = arith.constant 1 : i32
    %1 = tpu.dynamic_rotate %0 by %c1_i32 dim 1 : vector<8x128xf32>, i32 -> vector<8x128xf32>
    %c0_1 = arith.constant 0 : index
    %c0_2 = arith.constant 0 : index
    %2 = vector.load %arg1[%c0_1, %c0_2] : memref<8x128xf32, #tpu.memory_space<vmem>>, vector<8x128xf32>
    tpu.vector_store %arg1[%c0_1, %c0_2], %1 {strides = array<i32>} : memref<8x128xf32, #tpu.memory_space<vmem>>, vector<8x128xf32>,
    return
  }
}

</mosaic_0001>

<llo_original>
// kernel: tpu_custom_call.1
$region0: #{tpu_custom_call.1}
  #allocation0 [shape = 'u32[]', space=smem, size = 0x4, offset = 0x4, fixed_abs, tag = 'smem constant byte address 0x4 - core index']
  #allocation1 [shape = 'u32[144,128]{1,0:T(1,128)}', space=vmem, size = 0x12000, scoped, tag = 'internal scratch']
  %s0 = inlined_call_operand.hbm [shape: f32[8,128], index: 0, kind: input, shape index: {}]
  %s1 = inlined_call_operand.hbm [shape: f32[8,128], index: 1, kind: output, shape index: {}]
  %s2 = sld [smem:[#allocation0]]
  $region18: #{tpu_custom_call.1} parent=0
    _
  %s4 = ssub.s32 1, %s2
  %s5 = scalar_select 0, %s4, %s2
  $region1: #{tpu_custom_call.1} parent=0
    #allocation2 [shape = 'u8[4096]{0}', space=vmem, size = 0x1000, scoped, tag = 'input window, operand 0, single buffered']
    #allocation3 [shape = 's32[1]{0}', space=sflag, size = 0x4, scoped, tag = 'scoped memory for tpu_custom_call.1']
    #allocation4 [shape = 's32[1]{0}', space=sflag, size = 0x4, scoped, tag = 'scoped memory for tpu_custom_call.1']
    #allocation5 [shape = 'u8[4096]{0}', space=vmem, size = 0x1000, scoped, tag = 'output window, operand 0, single buffered']
    %6 = vsyncpa [#allocation3], 0
    %7 = vsyncpa [#allocation4], 0
    // Predicated region
    $region2: #{tpu_custom_call.1} parent=1 // pred_check
      _
    $region3: #{tpu_custom_call.1} parent=1 // pred_check_branch
      %9 = sbr.rel (0) target = $region5
    $region4: #{tpu_custom_call.1} parent=1 // pred_region
      %s11 = ssub.s32 128, 128
      %12 = vsyncadd [#allocation3], %s11
      %s14 = sshll.u32 [#allocation2], 4
      %s15 = int_to_ptr.vmem [resolvable:$true] %s14
      %17 = dma.hbm_to_vmem [thread:$0]  %s0, 128, %s15, [#allocation3]
    $region5: #{tpu_custom_call.1} parent=1 // pred_fallthru
      _
    // Predicated region
    $region6: #{tpu_custom_call.1} parent=1 // pred_check
      _
    $region7: #{tpu_custom_call.1} parent=1 // pred_check_branch
      %19 = sbr.rel (0) target = $region9
    $region8: #{tpu_custom_call.1} parent=1 // pred_region
      %20 = dma.done [#allocation3], 128
    $region9: #{tpu_custom_call.1} parent=1 // pred_fallthru
      _
    %v21 = vld [vmem:[#allocation2] sm:$0xff]
    %22 = vrot.lane.b32.xlu0 %v21, 1
    %v23 = vpop.permute.xlu0 %22
    %24 = vst [vmem:[#allocation5] sm:$0xff] %v23
    // Predicated region
    $region10: #{tpu_custom_call.1} parent=1 // pred_check
      _
    $region11: #{tpu_custom_call.1} parent=1 // pred_check_branch
      %26 = sbr.rel (0) target = $region13
    $region12: #{tpu_custom_call.1} parent=1 // pred_region
      %s28 = ssub.s32 128, 128
      %29 = vsyncadd [#allocation4], %s28
      %s31 = sshll.u32 [#allocation5], 4
      %s32 = int_to_ptr.vmem [resolvable:$true] %s31
      %34 = dma.vmem_to_hbm [thread:$0]  %s32, 128, %s1, [#allocation4]
    $region13: #{tpu_custom_call.1} parent=1 // pred_fallthru
      _
    // Predicated region
    $region14: #{tpu_custom_call.1} parent=1 // pred_check
      _
    $region15: #{tpu_custom_call.1} parent=1 // pred_check_branch
      %36 = sbr.rel (0) target = $region17
    $region16: #{tpu_custom_call.1} parent=1 // pred_region
      %37 = dma.done [#allocation4], 128
    $region17: #{tpu_custom_call.1} parent=1 // pred_fallthru
      _
    %38 = vsyncpa [#allocation3], 1
    %39 = vsyncpa [#allocation4], 1

</llo_original>
